<compile_context>
chip_gen: v5e
topology: v5e:2x2
jax: 0.10.0
libtpu: 0.0.40
codegen_flags: <defaults>
</compile_context>

<pallas_src>
import math

import jax
import jax.numpy as jnp
from jax import lax
from jax.experimental import pallas as pl
from jax.experimental.pallas import tpu as pltpu


# ---------------------------------------------------------------------------
# tiling helpers
# ---------------------------------------------------------------------------

def _round_up(x, q):
    return -(-x // q) * q


def _vmem_budget_bytes():
    """Scoped-VMEM budget: ~60% of physical VMEM, clamped to [24, 64] MiB."""
    cap = 64 << 20                      # conservative fallback (v7x physical size)
    try:
        info = pltpu.get_tpu_info()
        cap = int(getattr(info, "vmem_capacity_bytes", cap))
    except Exception:
        pass
    return max(min(int(cap * 0.6), 64 << 20), 24 << 20)


def _target_block_bytes(budget):
    # 2x double-buffered input + 2x output blocks + params + f32 temporaries
    # must fit under `budget`; 2-6 MiB blocks already sit at ~85%+ of HBM roofline.
    return min(max(budget // 8, 2 << 20), 6 << 20)


def _row_tile(M, row_bytes, target_bytes):
    """Rows per block: as big as the VMEM budget allows, but keep >= ~8 grid steps
    (v7x has 2 TensorCores) unless that would shrink blocks below ~1 MiB."""
    row_bytes = max(row_bytes, 1)
    tm = max((target_bytes // row_bytes) // 8 * 8, 8)
    min_tm = max(((1 << 20) // row_bytes) // 8 * 8, 8)
    tm = max(min(tm, _round_up(pl.cdiv(M, 8), 8)), min(min_tm, _round_up(M, 8)))
    if tm >= M:
        return M                        # full extent is always a legal block
    return tm


# ---------------------------------------------------------------------------
# kernels
# ---------------------------------------------------------------------------

def _ln_last_kernel(eps):
    """x block (tm, C): normalize each row over the full lane axis."""
    def kernel(x_ref, w_ref, b_ref, o_ref):
        x = x_ref[...].astype(jnp.float32)
        mean = jnp.mean(x, axis=-1, keepdims=True)
        xc = x - mean
        var = jnp.mean(xc * xc, axis=-1, keepdims=True)       # biased, like F.layer_norm
        y = xc * lax.rsqrt(var + eps) * w_ref[...] + b_ref[...]
        o_ref[...] = y.astype(o_ref.dtype)
    return kernel


def _ln_last_packed_kernel(eps):
    """k logical rows packed per physical row (lane width k*C, multiple of 128).
    Per-group mean/var = segmented reduction via a block-diagonal averaging matmul."""
    def kernel(x_ref, w_ref, b_ref, seg_ref, o_ref):
        x = x_ref[...].astype(jnp.float32)                     # (tm, k*C)
        seg = seg_ref[...]                                     # (k*C, k*C) block-diag 1/C
        mean = jnp.dot(x, seg, preferred_element_type=jnp.float32)
        xc = x - mean
        var = jnp.dot(xc * xc, seg, preferred_element_type=jnp.float32)
        y = xc * lax.rsqrt(var + eps) * w_ref[...] + b_ref[...]
        o_ref[...] = y.astype(o_ref.dtype)
    return kernel


def _ln_first_kernel(eps):
    """x block (tb, C, ts): normalize over the channel (sublane) axis."""
    def kernel(x_ref, w_ref, b_ref, o_ref):
        x = x_ref[...].astype(jnp.float32)                     # (tb, C, ts)
        mean = jnp.mean(x, axis=1, keepdims=True)
        xc = x - mean
        var = jnp.mean(xc * xc, axis=1, keepdims=True)
        y = xc * lax.rsqrt(var + eps) * w_ref[...] + b_ref[...]   # w/b: (1, C, 1)
        o_ref[...] = y.astype(o_ref.dtype)
    return kernel


# ---------------------------------------------------------------------------
# wrappers
# ---------------------------------------------------------------------------

def layer_norm_channels_last(x, weight, bias, eps=1e-6):
    """x: (..., C); weight/bias: (C,). Normalizes over the last dim."""
    orig_shape = x.shape
    C = orig_shape[-1]
    M = math.prod(orig_shape[:-1])
    itemsize = x.dtype.itemsize
    budget = _vmem_budget_bytes()
    target = _target_block_bytes(budget)

    w = weight.astype(jnp.float32).reshape(-1)
    b = bias.astype(jnp.float32).reshape(-1)

    # Small C: pack k rows per physical row so the output lane width is a multiple
    # of 128 (lane-dense stores). The reshape (M, C) -> (M//k, k*C) is free (row-major).
    k = 128 // math.gcd(C, 128)
    if C < 128 and k * C <= 512 and M > 0 and M % k == 0:
        kC = k * C
        Mp = M // k
        x2 = x.reshape(Mp, kC)
        w2 = jnp.tile(w, (k,)).reshape(1, kC)
        b2 = jnp.tile(b, (k,)).reshape(1, kC)
        seg = jnp.kron(jnp.eye(k, dtype=jnp.float32),
                       jnp.full((C, C), 1.0 / C, jnp.float32))
        tm = _row_tile(Mp, kC * itemsize, target)
        grid = (pl.cdiv(Mp, tm),)
        cost = pl.CostEstimate(
            flops=10 * M * C + 4 * M * C * kC,
            transcendentals=M,
            bytes_accessed=2 * x2.size * itemsize + (2 * kC + kC * kC) * 4,
        )
        out = pl.pallas_call(
            _ln_last_packed_kernel(eps),
            out_shape=jax.ShapeDtypeStruct((Mp, kC), x.dtype),
            grid_spec=pltpu.PrefetchScalarGridSpec(
                num_scalar_prefetch=0,
                grid=grid,
                in_specs=[
                    pl.BlockSpec((tm, kC), lambda i: (i, 0)),
                    pl.BlockSpec((1, kC), lambda i: (0, 0)),
                    pl.BlockSpec((1, kC), lambda i: (0, 0)),
                    pl.BlockSpec((kC, kC), lambda i: (0, 0)),
                ],
                out_specs=pl.BlockSpec((tm, kC), lambda i: (i, 0)),
            ),
            compiler_params=pltpu.CompilerParams(
                dimension_semantics=("parallel",),
                vmem_limit_bytes=budget,
            ),
            cost_estimate=cost,
        )(x2, w2, b2, seg)
        return out.reshape(orig_shape)

    # General path: the whole C extent lives in one block on the lane axis.
    # TODO(synk): for extremely large C (a single (8, C) f32 block exceeding the VMEM
    # budget), add a split-C two-pass kernel (sum/sumsq accumulation over a C grid
    # axis, then a normalize pass) instead of holding C whole.
    x2 = x.reshape(M, C)
    w2 = w.reshape(1, C)
    b2 = b.reshape(1, C)
    tm = _row_tile(M, C * itemsize, target)
    grid = (pl.cdiv(M, tm),)
    cost = pl.CostEstimate(
        flops=10 * M * C,
        transcendentals=M,
        bytes_accessed=2 * x2.size * itemsize + 2 * C * 4,
    )
    out = pl.pallas_call(
        _ln_last_kernel(eps),
        out_shape=jax.ShapeDtypeStruct((M, C), x.dtype),
        grid_spec=pltpu.PrefetchScalarGridSpec(
            num_scalar_prefetch=0,
            grid=grid,
            in_specs=[
                pl.BlockSpec((tm, C), lambda i: (i, 0)),
                pl.BlockSpec((1, C), lambda i: (0, 0)),
                pl.BlockSpec((1, C), lambda i: (0, 0)),
            ],
            out_specs=pl.BlockSpec((tm, C), lambda i: (i, 0)),
        ),
        compiler_params=pltpu.CompilerParams(
            dimension_semantics=("parallel",),
            vmem_limit_bytes=budget,
        ),
        cost_estimate=cost,
    )(x2, w2, b2)
    return out.reshape(orig_shape)


def layer_norm_channels_first(x, weight, bias, eps=1e-6):
    """x: (B, C, *spatial); weight/bias: (C,). Normalizes over the channel dim."""
    B, C = x.shape[0], x.shape[1]
    HW = math.prod(x.shape[2:])
    itemsize = x.dtype.itemsize
    budget = _vmem_budget_bytes()
    target = _target_block_bytes(budget)

    x3 = x.reshape(B, C, HW)
    w3 = weight.astype(jnp.float32).reshape(1, C, 1)
    b3 = bias.astype(jnp.float32).reshape(1, C, 1)

    c_pad = _round_up(C, 8)                    # sublane padding of C in VMEM
    slab_bytes = c_pad * HW * itemsize         # one batch entry in VMEM

    if slab_bytes > target and HW > 128:
        # One batch entry per step; tile the spatial (lane) axis from the budget.
        tb = 1
        ts = max((target // max(c_pad * itemsize, 1)) // 128 * 128, 128)
        if ts >= HW:
            ts = HW
    else:
        # Whole spatial extent per step; block several batch entries together so
        # blocks stay >= ~1 MiB, but keep >= ~8 steps for the v7x 2-TC split.
        ts = HW
        tb = int(min(max(target // max(slab_bytes, 1), 1), B))
        min_tb = int(min(max((1 << 20) // max(slab_bytes, 1), 1), B))
        tb = max(min(tb, pl.cdiv(B, 8)), min_tb)

    grid = (pl.cdiv(B, tb), pl.cdiv(HW, ts))
    block_bytes = tb * c_pad * ts * itemsize
    n_steps = grid[0] * grid[1]

    def x_map(i, j):
        return (i, 0, j)

    if block_bytes < (512 << 10) and n_steps > 4:
        # Small blocks expose DMA issue latency; deepen the input pipeline a bit.
        x_spec = pl.BlockSpec((tb, C, ts), x_map, pipeline_mode=pl.Buffered(3))
    else:
        x_spec = pl.BlockSpec((tb, C, ts), x_map)

    cost = pl.CostEstimate(
        flops=10 * B * C * HW,
        transcendentals=B * HW,
        bytes_accessed=2 * x3.size * itemsize + 2 * C * 4,
    )
    out = pl.pallas_call(
        _ln_first_kernel(eps),
        out_shape=jax.ShapeDtypeStruct((B, C, HW), x.dtype),
        grid_spec=pltpu.PrefetchScalarGridSpec(
            num_scalar_prefetch=0,
            grid=grid,
            in_specs=[
                x_spec,
                pl.BlockSpec((1, C, 1), lambda i, j: (0, 0, 0)),
                pl.BlockSpec((1, C, 1), lambda i, j: (0, 0, 0)),
            ],
            out_specs=pl.BlockSpec((tb, C, ts), x_map),
        ),
        compiler_params=pltpu.CompilerParams(
            dimension_semantics=("parallel", "parallel"),
            vmem_limit_bytes=budget,
        ),
        cost_estimate=cost,
    )(x3, w3, b3)
    return out.reshape(x.shape)


def layer_norm(x, weight, bias, eps=1e-6, data_format="channels_last"):
    if data_format == "channels_last":
        return layer_norm_channels_last(x, weight, bias, eps)
    elif data_format == "channels_first":
        return layer_norm_channels_first(x, weight, bias, eps)
    raise NotImplementedError(data_format)


# ---------------------------------------------------------------------------
# self-test
# ---------------------------------------------------------------------------

if __name__ == "__main__":
    B, C, H, W = 2, 4, 16, 16
    eps = 1e-6

    key = jax.random.PRNGKey(0)
    kx1, kx2, kx3, kw, kb = jax.random.split(key, 5)

    # Module init is weight=ones, bias=zeros; perturb deterministically so the
    # affine part is actually exercised.
    weight = jnp.ones((C,), jnp.float32) + 0.1 * jax.random.normal(kw, (C,), jnp.float32)
    bias = jnp.zeros((C,), jnp.float32) + 0.05 * jax.random.normal(kb, (C,), jnp.float32)

    # --- channels_last, small-C packed path: (B, H, W, C), normalize over C ---
    x_last = jax.random.normal(kx1, (B, H, W, C), jnp.float32)
    out_last = jax.block_until_ready(
        layer_norm(x_last, weight, bias, eps=eps, data_format="channels_last"))
    u = x_last.mean(-1, keepdims=True)
    s = ((x_last - u) ** 2).mean(-1, keepdims=True)
    ref_last = (x_last - u) / jnp.sqrt(s + eps) * weight + bias
    assert out_last.shape == x_last.shape
    assert jnp.allclose(out_last, ref_last, atol=1e-5, rtol=1e-5)

    # --- channels_last, general path (C >= 128) ---
    C2 = 160
    w_big = jnp.ones((C2,), jnp.float32) + 0.1 * jax.random.normal(kw, (C2,), jnp.float32)
    b_big = jnp.zeros((C2,), jnp.float32) + 0.05 * jax.random.normal(kb, (C2,), jnp.float32)
    x_big = jax.random.normal(kx3, (2, 8, C2), jnp.float32)
    out_big = jax.block_until_ready(
        layer_norm(x_big, w_big, b_big, eps=eps, data_format="channels_last"))
    u = x_big.mean(-1, keepdims=True)
    s = ((x_big - u) ** 2).mean(-1, keepdims=True)
    ref_big = (x_big - u) / jnp.sqrt(s + eps) * w_big + b_big
    assert jnp.allclose(out_big, ref_big, atol=1e-5, rtol=1e-5)

    # --- channels_first: (B, C, H, W), normalize over the channel dim ---
    x_first = jax.random.normal(kx2, (B, C, H, W), jnp.float32)
    out_first = jax.block_until_ready(
        layer_norm(x_first, weight, bias, eps=eps, data_format="channels_first"))
    u = x_first.mean(1, keepdims=True)
    s = ((x_first - u) ** 2).mean(1, keepdims=True)
    ref_first = (x_first - u) / jnp.sqrt(s + eps)
    ref_first = weight[:, None, None] * ref_first + bias[:, None, None]
    assert out_first.shape == x_first.shape
    assert jnp.allclose(out_first, ref_first, atol=1e-5, rtol=1e-5)

    print("KERNEL_OK")
</pallas_src>

<mosaic_0001>
module attributes {stable_mosaic.version = 11 : i64} {
  func.func @kernel(%arg0: i32, %arg1: memref<16x128xf32, #tpu.memory_space<vmem>>, %arg2: memref<1x128xf32, #tpu.memory_space<vmem>>, %arg3: memref<1x128xf32, #tpu.memory_space<vmem>>, %arg4: memref<128x128xf32, #tpu.memory_space<vmem>>, %arg5: memref<16x128xf32, #tpu.memory_space<vmem>>) attributes {dimension_semantics = [#tpu.dimension_semantics<parallel>], iteration_bounds = array<i64: 1>, scalar_prefetch = 0 : i64, scratch_operands = 0 : i64, tpu.core_type = #tpu.core_type<tc>, window_params = [{transform_indices = @transform_0, window_bounds = array<i64: 16, 128>}, {pipeline_mode = #tpu.pipeline_mode<synchronous>, transform_indices = @transform_1, window_bounds = array<i64: 1, 128>}, {pipeline_mode = #tpu.pipeline_mode<synchronous>, transform_indices = @transform_2, window_bounds = array<i64: 1, 128>}, {pipeline_mode = #tpu.pipeline_mode<synchronous>, transform_indices = @transform_3, window_bounds = array<i64: 128, 128>}, {transform_indices = @transform_4, window_bounds = array<i64: 16, 128>}]} {
    %c0 = arith.constant 0 : index
    %c0_0 = arith.constant 0 : index
    %0 = vector.load %arg1[%c0, %c0_0] : memref<16x128xf32, #tpu.memory_space<vmem>>, vector<16x128xf32>
    %c0_1 = arith.constant 0 : index
    %c0_2 = arith.constant 0 : index
    %1 = vector.load %arg4[%c0_1, %c0_2] : memref<128x128xf32, #tpu.memory_space<vmem>>, vector<128x128xf32>
    %cst = arith.constant dense<0.000000e+00> : vector<16x128xf32>
    %2 = tpu.matmul %0, %1, %cst {dimension_numbers = #tpu.dot_dimension_numbers<[1], [0], [0], [1], [0, 0, 1, 1], [], []>} : vector<16x128xf32>, vector<128x128xf32>, vector<16x128xf32> -> vector<16x128xf32>
    %3 = arith.subf %0, %2 : vector<16x128xf32>
    %4 = arith.mulf %3, %3 : vector<16x128xf32>
    %cst_3 = arith.constant dense<0.000000e+00> : vector<16x128xf32>
    %5 = tpu.matmul %4, %1, %cst_3 {dimension_numbers = #tpu.dot_dimension_numbers<[1], [0], [0], [1], [0, 0, 1, 1], [], []>} : vector<16x128xf32>, vector<128x128xf32>, vector<16x128xf32> -> vector<16x128xf32>
    %cst_4 = arith.constant 9.99999997E-7 : f32
    %6 = vector.broadcast %cst_4 : f32 to vector<16x128xf32>
    %7 = arith.addf %5, %6 : vector<16x128xf32>
    %8 = math.rsqrt %7 : vector<16x128xf32>
    %9 = arith.mulf %3, %8 : vector<16x128xf32>
    %c0_5 = arith.constant 0 : index
    %c0_6 = arith.constant 0 : index
    %10 = vector.load %arg2[%c0_5, %c0_6] : memref<1x128xf32, #tpu.memory_space<vmem>>, vector<1x128xf32>
    %11 = vector.broadcast %10 : vector<1x128xf32> to vector<16x128xf32>
    %12 = arith.mulf %9, %11 : vector<16x128xf32>
    %c0_7 = arith.constant 0 : index
    %c0_8 = arith.constant 0 : index
    %13 = vector.load %arg3[%c0_7, %c0_8] : memref<1x128xf32, #tpu.memory_space<vmem>>, vector<1x128xf32>
    %14 = vector.broadcast %13 : vector<1x128xf32> to vector<16x128xf32>
    %15 = arith.addf %12, %14 : vector<16x128xf32>
    %c0_9 = arith.constant 0 : index
    %c0_10 = arith.constant 0 : index
    %16 = vector.load %arg5[%c0_9, %c0_10] : memref<16x128xf32, #tpu.memory_space<vmem>>, vector<16x128xf32>
    tpu.vector_store %arg5[%c0_9, %c0_10], %15 {strides = array<i32>} : memref<16x128xf32, #tpu.memory_space<vmem>>, vector<16x128xf32>,
    return
  }
  func.func @transform_0(%arg0: i32) -> (i32, i32) {
    %c0_i32 = arith.constant 0 : i32
    %c0_i32_0 = arith.constant 0 : i32
    return %arg0, %c0_i32 : i32, i32
  }
  func.func @transform_1(%arg0: i32) -> (i32, i32) {
    %c0_i32 = arith.constant 0 : i32
    %c0_i32_0 = arith.constant 0 : i32
    %c0_i32_1 = arith.constant 0 : i32
    return %c0_i32, %c0_i32_0 : i32, i32
  }
  func.func @transform_2(%arg0: i32) -> (i32, i32) {
    %c0_i32 = arith.constant 0 : i32
    %c0_i32_0 = arith.constant 0 : i32
    %c0_i32_1 = arith.constant 0 : i32
    return %c0_i32, %c0_i32_0 : i32, i32
  }
  func.func @transform_3(%arg0: i32) -> (i32, i32) {
    %c0_i32 = arith.constant 0 : i32
    %c0_i32_0 = arith.constant 0 : i32
    %c0_i32_1 = arith.constant 0 : i32
    return %c0_i32, %c0_i32_0 : i32, i32
  }
  func.func @transform_4(%arg0: i32) -> (i32, i32) {
    %c0_i32 = arith.constant 0 : i32
    %c0_i32_0 = arith.constant 0 : i32
    return %arg0, %c0_i32 : i32, i32
  }
}

</mosaic_0001>

<llo_original>
// kernel: tpu_custom_call.1
$region0: #{tpu_custom_call.1}
  #allocation0 [shape = 'u32[]', space=smem, size = 0x4, offset = 0x4, fixed_abs, tag = 'smem constant byte address 0x4 - core index']
  #allocation1 [shape = 'u32[72,128]{1,0:T(1,128)}', space=vmem, size = 0x9000, scoped, tag = 'internal scratch']
  %s0 = inlined_call_operand.hbm [shape: f32[16,128], index: 0, kind: input, shape index: {}]
  %s1 = inlined_call_operand.hbm [shape: f32[1,128], index: 1, kind: input, shape index: {}]
  %s2 = inlined_call_operand.vmem [shape: f32[1,128], index: 2, kind: input, shape index: {}]
  %s3 = inlined_call_operand.hbm [shape: f32[128,128], index: 3, kind: input, shape index: {}]
  %s4 = inlined_call_operand.hbm [shape: f32[16,128], index: 4, kind: output, shape index: {}]
  %s5 = sld [smem:[#allocation0]]
  $region38: #{tpu_custom_call.1} parent=0
    _
  %s7 = ssub.s32 1, %s5
  %s8 = scalar_select 0, %s7, %s5
  $region1: #{tpu_custom_call.1} parent=0
    #allocation2 [shape = 'u8[8192]{0}', space=vmem, size = 0x2000, scoped, tag = 'input window, operand 0, single buffered']
    #allocation3 [shape = 's32[1]{0}', space=sflag, size = 0x4, scoped, tag = 'scoped memory for tpu_custom_call.1']
    #allocation4 [shape = 's32[1]{0}', space=sflag, size = 0x4, scoped, tag = 'scoped memory for tpu_custom_call.1']
    #allocation5 [shape = 'u8[512]{0}', space=vmem, size = 0x400, scoped, tag = 'input window, operand 1, single buffered']
    #allocation6 [shape = 's32[1]{0}', space=sflag, size = 0x4, scoped, tag = 'scoped memory for tpu_custom_call.1']
    #allocation7 [shape = 'u8[65536]{0}', space=vmem, size = 0x10000, scoped, tag = 'input window, operand 3, single buffered']
    #allocation8 [shape = 'u8[8192]{0}', space=vmem, size = 0x2000, scoped, tag = 'output window, operand 0, single buffered']
    %9 = vsyncpa [#allocation3], 0
    %10 = vsyncpa [#allocation6], 0
    %11 = vsyncpa [#allocation4], 0
    // Predicated region
    $region2: #{tpu_custom_call.1} parent=1 // pred_check
      _
    $region3: #{tpu_custom_call.1} parent=1 // pred_check_branch
      %13 = sbr.rel (0) target = $region5
    $region4: #{tpu_custom_call.1} parent=1 // pred_region
      %15 = vsyncadd [#allocation3], 0
      %s16 = sshll.u32 %s0, 4
      %s17 = int_to_ptr.hbm [resolvable:$true] %s16
      %s18 = sshll.u32 [#allocation2], 4
      %s19 = int_to_ptr.vmem [resolvable:$true] %s18
      %24 = dma.hbm_to_vmem [thread:$0]  %s17, 256, %s19, [#allocation3], 128, 128, 8
    $region5: #{tpu_custom_call.1} parent=1 // pred_fallthru
      _
    // Predicated region
    $region6: #{tpu_custom_call.1} parent=1 // pred_check
      _
    $region7: #{tpu_custom_call.1} parent=1 // pred_check_branch
      %26 = sbr.rel (0) target = $region9
    $region8: #{tpu_custom_call.1} parent=1 // pred_region
      %28 = vsyncadd [#allocation6], 0
      %s30 = sshll.u32 %s1, 4
      %s31 = int_to_ptr.hbm [resolvable:$true] %s30
      %s32 = sshll.u32 [#allocation5], 4
      %s33 = int_to_ptr.vmem [resolvable:$true] %s32
      %35 = dma.hbm_to_vmem [thread:$0]  %s31, 16, %s33, [#allocation6]
    $region9: #{tpu_custom_call.1} parent=1 // pred_fallthru
      _
    // Predicated region
    $region10: #{tpu_custom_call.1} parent=1 // pred_check
      _
    $region11: #{tpu_custom_call.1} parent=1 // pred_check_branch
      %37 = sbr.rel (0) target = $region13
    $region12: #{tpu_custom_call.1} parent=1 // pred_region
      _
    $region13: #{tpu_custom_call.1} parent=1 // pred_fallthru
      _
    // Predicated region
    $region14: #{tpu_custom_call.1} parent=1 // pred_check
      _
    $region15: #{tpu_custom_call.1} parent=1 // pred_check_branch
      %39 = sbr.rel (0) target = $region17
    $region16: #{tpu_custom_call.1} parent=1 // pred_region
      %41 = vsyncadd [#allocation6], 0
      %s42 = sshll.u32 %s3, 4
      %s43 = int_to_ptr.hbm [resolvable:$true] %s42
      %s44 = sshll.u32 [#allocation7], 4
      %s45 = int_to_ptr.vmem [resolvable:$true] %s44
      %50 = dma.hbm_to_vmem [thread:$0]  %s43, 2048, %s45, [#allocation6], 128, 128, 8
    $region17: #{tpu_custom_call.1} parent=1 // pred_fallthru
      _
    // Predicated region
    $region18: #{tpu_custom_call.1} parent=1 // pred_check
      _
    $region19: #{tpu_custom_call.1} parent=1 // pred_check_branch
      %52 = sbr.rel (0) target = $region21
    $region20: #{tpu_custom_call.1} parent=1 // pred_region
      %54 = dma.done [#allocation3], 256
    $region21: #{tpu_custom_call.1} parent=1 // pred_fallthru
      _
    // Predicated region
    $region22: #{tpu_custom_call.1} parent=1 // pred_check
      _
    $region23: #{tpu_custom_call.1} parent=1 // pred_check_branch
      %56 = sbr.rel (0) target = $region25
    $region24: #{tpu_custom_call.1} parent=1 // pred_region
      %58 = dma.done [#allocation6], 16
    $region25: #{tpu_custom_call.1} parent=1 // pred_fallthru
      _
    // Predicated region
    $region26: #{tpu_custom_call.1} parent=1 // pred_check
      _
    $region27: #{tpu_custom_call.1} parent=1 // pred_check_branch
      %60 = sbr.rel (0) target = $region29
    $region28: #{tpu_custom_call.1} parent=1 // pred_region
      %62 = dma.done [#allocation6], 2048
    $region29: #{tpu_custom_call.1} parent=1 // pred_fallthru
      _
    %v63 = vld [vmem:[#allocation2] sm:$0xff]
    %v64 = vld [vmem:[#allocation2 + $0x8] sm:$0xff]
    %v65 = vld [vmem:[#allocation7] sm:$0xff]
    %v66 = vld [vmem:[#allocation7 + $0x8] sm:$0xff]
    %v67 = vld [vmem:[#allocation7 + $0x10] sm:$0xff]
    %v68 = vld [vmem:[#allocation7 + $0x18] sm:$0xff]
    %v69 = vld [vmem:[#allocation7 + $0x20] sm:$0xff]
    %v70 = vld [vmem:[#allocation7 + $0x28] sm:$0xff]
    %v71 = vld [vmem:[#allocation7 + $0x30] sm:$0xff]
    %v72 = vld [vmem:[#allocation7 + $0x38] sm:$0xff]
    %v73 = vld [vmem:[#allocation7 + $0x40] sm:$0xff]
    %v74 = vld [vmem:[#allocation7 + $0x48] sm:$0xff]
    %v75 = vld [vmem:[#allocation7 + $0x50] sm:$0xff]
    %v76 = vld [vmem:[#allocation7 + $0x58] sm:$0xff]
    %v77 = vld [vmem:[#allocation7 + $0x60] sm:$0xff]
    %v78 = vld [vmem:[#allocation7 + $0x68] sm:$0xff]
    %v79 = vld [vmem:[#allocation7 + $0x70] sm:$0xff]
    %v80 = vld [vmem:[#allocation7 + $0x78] sm:$0xff]
    %81 = vmatpush.msra.mxu0 %v80
    %82 = vmatpush.msra.mxu0 %v79
    %83 = vmatpush.msra.mxu0 %v78
    %84 = vmatpush.msra.mxu0 %v77
    %85 = vmatpush.msra.mxu0 %v76
    %86 = vmatpush.msra.mxu0 %v75
    %87 = vmatpush.msra.mxu0 %v74
    %88 = vmatpush.msra.mxu0 %v73
    %89 = vmatpush.msra.mxu0 %v72
    %90 = vmatpush.msra.mxu0 %v71
    %91 = vmatpush.msra.mxu0 %v70
    %92 = vmatpush.msra.mxu0 %v69
    %93 = vmatpush.msra.mxu0 %v68
    %94 = vmatpush.msra.mxu0 %v67
    %95 = vmatpush.msra.mxu0 %v66
    %96 = vmatpush.msra.mxu0 %v65
    %97 = vmatmul.f32.gmra.mxu0 %v63
    %v98 = vpop.f32.mrf.mxu0
    %v99 = vadd.f32 0.0, %v98
    %100 = vmatmul.f32.gmra.mxu0 %v64
    %v101 = vpop.f32.mrf.mxu0
    %v102 = vadd.f32 0.0, %v101
    %103 = vdwg.mxu0
    %v104 = vsub.f32 %v63, %v99
    %v105 = vsub.f32 %v64, %v102
    %v106 = vmul.f32 %v104, %v104
    %v107 = vmul.f32 %v105, %v105
    %108 = vmatpush.msra.mxu0 %v80
    %109 = vmatpush.msra.mxu0 %v79
    %110 = vmatpush.msra.mxu0 %v78
    %111 = vmatpush.msra.mxu0 %v77
    %112 = vmatpush.msra.mxu0 %v76
    %113 = vmatpush.msra.mxu0 %v75
    %114 = vmatpush.msra.mxu0 %v74
    %115 = vmatpush.msra.mxu0 %v73
    %116 = vmatpush.msra.mxu0 %v72
    %117 = vmatpush.msra.mxu0 %v71
    %118 = vmatpush.msra.mxu0 %v70
    %119 = vmatpush.msra.mxu0 %v69
    %120 = vmatpush.msra.mxu0 %v68
    %121 = vmatpush.msra.mxu0 %v67
    %122 = vmatpush.msra.mxu0 %v66
    %123 = vmatpush.msra.mxu0 %v65
    %124 = vmatmul.f32.gmra.mxu0 %v106
    %v125 = vpop.f32.mrf.mxu0
    %v126 = vadd.f32 1e-06, %v125
    %127 = vmatmul.f32.gmra.mxu0 %v107
    %v128 = vpop.f32.mrf.mxu0
    %v129 = vadd.f32 1e-06, %v128
    %130 = vdwg.mxu0
    %v131 = vrsqrt.pop %v126
    %v132 = vmul.f32 %v131, %v126
    %v133 = vmul.f32 %v132, %v131
    %v134 = vmul.f32 0.5, %v133
    %v135 = vsub.f32 1.5, %v134
    %v136 = vmul.f32 %v131, %v135
    %vm137 = vweird.f32 %v126
    %vm138 = vweird.f32 %v131
    %vm139 = vmor %vm137, %vm138
    %v140 = vsel %vm139, %v131, %v136
    %v141 = vrsqrt.pop %v129
    %v142 = vmul.f32 %v141, %v129
    %v143 = vmul.f32 %v142, %v141
    %v144 = vmul.f32 0.5, %v143
    %v145 = vsub.f32 1.5, %v144
    %v146 = vmul.f32 %v141, %v145
    %vm147 = vweird.f32 %v129
    %vm148 = vweird.f32 %v141
    %vm149 = vmor %vm147, %vm148
    %v150 = vsel %vm149, %v141, %v146
    %v151 = vmul.f32 %v104, %v140
    %v152 = vmul.f32 %v105, %v150
    %v153 = vld [vmem:[#allocation5] sm:$0x1]
    %v155 = vperm.slane %v153, 0
    %v157 = vmul.f32 %v151, %v155
    %v158 = vmul.f32 %v152, %v155
    %v159 = vld [vmem:[%s2] sm:$0x1]
    %v161 = vperm.slane %v159, 0
    %v163 = vadd.f32 %v157, %v161
    %v164 = vadd.f32 %v158, %v161
    %165 = vst [vmem:[#allocation8] sm:$0xff] %v163
    %166 = vst [vmem:[#allocation8 + $0x8] sm:$0xff] %v164
    // Predicated region
    $region30: #{tpu_custom_call.1} parent=1 // pred_check
      _
    $region31: #{tpu_custom_call.1} parent=1 // pred_check_branch
      %168 = sbr.rel (0) target = $region33
    $region32: #{tpu_custom_call.1} parent=1 // pred_region
      %170 = vsyncadd [#allocation4], 0
      %s171 = sshll.u32 [#allocation8], 4
      %s172 = int_to_ptr.vmem [resolvable:$true] %s171
      %s173 = sshll.u32 %s4, 4
      %s174 = int_to_ptr.hbm [resolvable:$true] %s173
      %179 = dma.vmem_to_hbm [thread:$0]  %s172, 256, %s174, [#allocation4], 128, 128, 8
    $region33: #{tpu_custom_call.1} parent=1 // pred_fallthru
      _
    // Predicated region
    $region34: #{tpu_custom_call.1} parent=1 // pred_check
      _
    $region35: #{tpu_custom_call.1} parent=1 // pred_check_branch
      %181 = sbr.rel (0) target = $region37
    $region36: #{tpu_custom_call.1} parent=1 // pred_region
      %183 = dma.done [#allocation4], 256
    $region37: #{tpu_custom_call.1} parent=1 // pred_fallthru
      _
    %184 = vsyncpa [#allocation3], 1
    %185 = vsyncpa [#allocation6], 1
    %186 = vsyncpa [#allocation4], 1

</llo_original>
